<compile_context>
chip_gen: v7x
topology: tpu7x:2x2x1
jax: 0.10.0
libtpu: 0.0.40
codegen_flags: <defaults>
</compile_context>

<pallas_src>
import functools

import jax
import jax.numpy as jnp
from jax import lax
from jax.experimental import pallas as pl
from jax.experimental.pallas import tpu as pltpu


def self_attention_kernel(x_ref, w_ref, out_ref, *, k_size):
    x = x_ref[...]                                   # (S, E)
    w = w_ref[...]                                   # (E, P), P = 128-padded

    # Fused, lane-dense QKV projection: one MXU stream instead of three.
    qkv = jnp.dot(x, w, preferred_element_type=jnp.float32)      # (S, P)

    q = qkv[:, :k_size]                              # (S, K)
    k = qkv[:, k_size:2 * k_size]                    # (S, K)

    # Keep V lane-padded at its fused offset: columns >= 2K hold Wv(x) in the
    # first v_size lanes and exact zeros elsewhere (weight was zero-padded),
    # so the final matmul and store stay 128-lane dense.
    lane = lax.broadcasted_iota(jnp.int32, qkv.shape, 1)
    v_pad = jnp.where(lane >= 2 * k_size, qkv, 0.0)  # (S, P)

    # Q @ K^T without materializing a transpose (contract both last dims).
    scores = lax.dot_general(
        q, k,
        dimension_numbers=(((1,), (1,)), ((), ())),
        preferred_element_type=jnp.float32,
    )                                                # (S, S)

    # Numerically-stable softmax over the last axis (== F.softmax(dim=-1)).
    # Faithful to the PyTorch source: no 1/sqrt(k_size) scaling.
    m = jnp.max(scores, axis=-1, keepdims=True)
    e = jnp.exp(scores - m)
    attn = e * pl.reciprocal(jnp.sum(e, axis=-1, keepdims=True), approx=True)

    # A = softmax(QK^T) @ V, emitted as a lane-dense (S, P) slab; the real
    # result lives in columns [2K, 2K + v_size), the rest stays zero.
    out_ref[...] = jnp.dot(attn, v_pad, preferred_element_type=jnp.float32)


def self_attention(x, wq_t, wk_t, wv_t):
    """x: (S, E); wq_t/wk_t: (E, K); wv_t: (E, V). Returns A: (S, V)."""
    seq_len, embed_size = x.shape
    k_size = wq_t.shape[1]
    v_size = wv_t.shape[1]

    fused = 2 * k_size + v_size
    padded = max(128, ((fused + 127) // 128) * 128)  # lane-dense width

    # [Wq^T | Wk^T | Wv^T | 0] — zero-pad so both matmuls are 128-lane dense.
    w_fused = jnp.concatenate(
        [wq_t, wk_t, wv_t,
         jnp.zeros((embed_size, padded - fused), dtype=x.dtype)],
        axis=1,
    )

    out_padded = pl.pallas_call(
        functools.partial(self_attention_kernel, k_size=k_size),
        out_shape=jax.ShapeDtypeStruct((seq_len, padded), jnp.float32),
        in_specs=[
            pl.BlockSpec(memory_space=pltpu.MemorySpace.VMEM),
            pl.BlockSpec(memory_space=pltpu.MemorySpace.VMEM),
        ],
        out_specs=pl.BlockSpec(memory_space=pltpu.MemorySpace.VMEM),
    )(x, w_fused)

    # Slice the real attention output out of the padded, lane-dense slab.
    return out_padded[:, 2 * k_size:2 * k_size + v_size]


def reference_self_attention(x, wq_t, wk_t, wv_t):
    q = x @ wq_t
    k = x @ wk_t
    v = x @ wv_t
    scores = q @ k.T
    w = jax.nn.softmax(scores, axis=-1)
    return w @ v


if __name__ == "__main__":
    # Small shapes consistent with the module's forward (2-D input).
    seq_len = 8
    embed_size = 32
    k_size = 16
    v_size = 16

    key = jax.random.PRNGKey(0)
    kx, kq, kk, kv = jax.random.split(key, 4)

    x = jax.random.normal(kx, (seq_len, embed_size), dtype=jnp.float32)
    # nn.Linear weight shape is (out, in); we store the transpose (in, out)
    # so x @ W^T matches nn.Linear(x) exactly.
    wq_t = jax.random.normal(kq, (embed_size, k_size), dtype=jnp.float32) * 0.1
    wk_t = jax.random.normal(kk, (embed_size, k_size), dtype=jnp.float32) * 0.1
    wv_t = jax.random.normal(kv, (embed_size, v_size), dtype=jnp.float32) * 0.1

    out = jax.block_until_ready(self_attention(x, wq_t, wk_t, wv_t))
    ref = reference_self_attention(x, wq_t, wk_t, wv_t)

    assert out.shape == (seq_len, v_size)
    # approx=True reciprocal → slightly looser tolerance than exact f32.
    assert jnp.allclose(out, ref, atol=5e-3, rtol=5e-3), float(
        jnp.max(jnp.abs(out - ref)))

    print("KERNEL_OK")
</pallas_src>

<mosaic_0001>
module attributes {stable_mosaic.version = 11 : i64} {
  func.func @self_attention_kernel(%arg0: memref<8x32xf32, #tpu.memory_space<vmem>>, %arg1: memref<32x128xf32, #tpu.memory_space<vmem>>, %arg2: memref<8x128xf32, #tpu.memory_space<vmem>>) attributes {dimension_semantics = [], scalar_prefetch = 0 : i64, scratch_operands = 0 : i64, tpu.core_type = #tpu.core_type<tc>} {
    %c0 = arith.constant 0 : index
    %c0_0 = arith.constant 0 : index
    %0 = vector.load %arg0[%c0, %c0_0] : memref<8x32xf32, #tpu.memory_space<vmem>>, vector<8x32xf32>
    %c0_1 = arith.constant 0 : index
    %c0_2 = arith.constant 0 : index
    %1 = vector.load %arg1[%c0_1, %c0_2] : memref<32x128xf32, #tpu.memory_space<vmem>>, vector<32x128xf32>
    %cst = arith.constant dense<0.000000e+00> : vector<8x128xf32>
    %2 = tpu.matmul %0, %1, %cst {dimension_numbers = #tpu.dot_dimension_numbers<[1], [0], [0], [1], [0, 0, 1, 1], [], []>} : vector<8x32xf32>, vector<32x128xf32>, vector<8x128xf32> -> vector<8x128xf32>
    %3 = vector.extract_strided_slice %2 {offsets = [0, 0], sizes = [8, 16], strides = [1, 1]} : vector<8x128xf32> to vector<8x16xf32>
    %4 = vector.extract_strided_slice %2 {offsets = [0, 16], sizes = [8, 16], strides = [1, 1]} : vector<8x128xf32> to vector<8x16xf32>
    %5 = tpu.iota {dimensions = array<i32: 1>} : vector<8x128xi32>
    %c32_i32 = arith.constant 32 : i32
    %6 = vector.broadcast %c32_i32 : i32 to vector<8x128xi32>
    %7 = arith.cmpi sge, %5, %6 : vector<8x128xi32>
    %cst_3 = arith.constant 0.000000e+00 : f32
    %8 = vector.broadcast %cst_3 : f32 to vector<8x128xf32>
    %9 = arith.select %7, %2, %8 : vector<8x128xi1>, vector<8x128xf32>
    %cst_4 = arith.constant dense<0.000000e+00> : vector<8x8xf32>
    %10 = tpu.matmul %3, %4, %cst_4 {dimension_numbers = #tpu.dot_dimension_numbers<[1], [1], [0], [0], [0, 0, 1, 0], [], []>} : vector<8x16xf32>, vector<8x16xf32>, vector<8x8xf32> -> vector<8x8xf32>
    %cst_5 = arith.constant dense<0xFF800000> : vector<8xf32>
    %11 = vector.multi_reduction <maximumf>, %10, %cst_5 [1] : vector<8x8xf32> to vector<8xf32>
    %12 = vector.shape_cast %11 : vector<8xf32> to vector<8x1xf32>
    %13 = vector.broadcast %12 : vector<8x1xf32> to vector<8x8xf32>
    %14 = arith.subf %10, %13 : vector<8x8xf32>
    %15 = math.exp %14 : vector<8x8xf32>
    %cst_6 = arith.constant dense<0.000000e+00> : vector<8xf32>
    %16 = vector.multi_reduction <add>, %15, %cst_6 [1] : vector<8x8xf32> to vector<8xf32>
    %17 = vector.shape_cast %16 : vector<8xf32> to vector<8x1xf32>
    %18 = tpu.reciprocal %17 {approx = true} : vector<8x1xf32> -> vector<8x1xf32>
    %19 = vector.broadcast %18 : vector<8x1xf32> to vector<8x8xf32>
    %20 = arith.mulf %15, %19 : vector<8x8xf32>
    %cst_7 = arith.constant dense<0.000000e+00> : vector<8x128xf32>
    %21 = tpu.matmul %20, %9, %cst_7 {dimension_numbers = #tpu.dot_dimension_numbers<[1], [0], [0], [1], [0, 0, 1, 1], [], []>} : vector<8x8xf32>, vector<8x128xf32>, vector<8x128xf32> -> vector<8x128xf32>
    %c0_8 = arith.constant 0 : index
    %c0_9 = arith.constant 0 : index
    %22 = vector.load %arg2[%c0_8, %c0_9] : memref<8x128xf32, #tpu.memory_space<vmem>>, vector<8x128xf32>
    tpu.vector_store %arg2[%c0_8, %c0_9], %21 {strides = array<i32>} : memref<8x128xf32, #tpu.memory_space<vmem>>, vector<8x128xf32>,
    return
  }
}

</mosaic_0001>

<llo_original>
// kernel: tpu_custom_call.1
$region0: #{tpu_custom_call.1}
  #allocation0 [shape = 'u32[]', space=smem, size = 0x4, offset = 0x4, fixed_abs, tag = 'smem constant byte address 0x4 - core index']
  #allocation1 [shape = 'u32[144,128]{1,0:T(1,128)}', space=vmem, size = 0x12000, scoped, tag = 'internal scratch']
  %s0 = inlined_call_operand.hbm [shape: f32[8,32], index: 0, kind: input, shape index: {}]
  %s1 = inlined_call_operand.hbm [shape: f32[32,128], index: 1, kind: input, shape index: {}]
  %s2 = inlined_call_operand.hbm [shape: f32[8,128], index: 2, kind: output, shape index: {}]
  %s3 = sld [smem:[#allocation0]]
  $region26: #{tpu_custom_call.1} parent=0
    _
  %s5 = ssub.s32 1, %s3
  %s6 = scalar_select 0, %s5, %s3
  $region1: #{tpu_custom_call.1} parent=0
    #allocation2 [shape = 'u8[4096]{0}', space=vmem, size = 0x1000, scoped, tag = 'input window, operand 0, single buffered']
    #allocation3 [shape = 's32[1]{0}', space=sflag, size = 0x4, scoped, tag = 'scoped memory for tpu_custom_call.1']
    #allocation4 [shape = 's32[1]{0}', space=sflag, size = 0x4, scoped, tag = 'scoped memory for tpu_custom_call.1']
    #allocation5 [shape = 'u8[16384]{0}', space=vmem, size = 0x4000, scoped, tag = 'input window, operand 1, single buffered']
    #allocation6 [shape = 's32[1]{0}', space=sflag, size = 0x4, scoped, tag = 'scoped memory for tpu_custom_call.1']
    #allocation7 [shape = 'u8[4096]{0}', space=vmem, size = 0x1000, scoped, tag = 'output window, operand 0, single buffered']
    %7 = vsyncpa [#allocation3], 0
    %8 = vsyncpa [#allocation6], 0
    %9 = vsyncpa [#allocation4], 0
    // Predicated region
    $region2: #{tpu_custom_call.1} parent=1 // pred_check
      _
    $region3: #{tpu_custom_call.1} parent=1 // pred_check_branch
      %11 = sbr.rel (0) target = $region5
    $region4: #{tpu_custom_call.1} parent=1 // pred_region
      %s13 = ssub.s32 128, 128
      %14 = vsyncadd [#allocation3], %s13
      %s16 = sshll.u32 [#allocation2], 4
      %s17 = int_to_ptr.vmem [resolvable:$true] %s16
      %19 = dma.hbm_to_vmem [thread:$0]  %s0, 128, %s17, [#allocation3]
    $region5: #{tpu_custom_call.1} parent=1 // pred_fallthru
      _
    // Predicated region
    $region6: #{tpu_custom_call.1} parent=1 // pred_check
      _
    $region7: #{tpu_custom_call.1} parent=1 // pred_check_branch
      %21 = sbr.rel (0) target = $region9
    $region8: #{tpu_custom_call.1} parent=1 // pred_region
      %s23 = ssub.s32 512, 512
      %24 = vsyncadd [#allocation6], %s23
      %s25 = sshll.u32 [#allocation5], 4
      %s26 = int_to_ptr.vmem [resolvable:$true] %s25
      %31 = dma.hbm_to_vmem [thread:$0]  %s1, 512, %s26, [#allocation6], 128, 128, 8
    $region9: #{tpu_custom_call.1} parent=1 // pred_fallthru
      _
    // Predicated region
    $region10: #{tpu_custom_call.1} parent=1 // pred_check
      _
    $region11: #{tpu_custom_call.1} parent=1 // pred_check_branch
      %33 = sbr.rel (0) target = $region13
    $region12: #{tpu_custom_call.1} parent=1 // pred_region
      %34 = dma.done [#allocation3], 128
    $region13: #{tpu_custom_call.1} parent=1 // pred_fallthru
      _
    // Predicated region
    $region14: #{tpu_custom_call.1} parent=1 // pred_check
      _
    $region15: #{tpu_custom_call.1} parent=1 // pred_check_branch
      %36 = sbr.rel (0) target = $region17
    $region16: #{tpu_custom_call.1} parent=1 // pred_region
      %37 = dma.done [#allocation6], 512
    $region17: #{tpu_custom_call.1} parent=1 // pred_fallthru
      _
    %v38 = vld [vmem:[#allocation2] sm:$0xff]
    %v39 = vld [vmem:[#allocation5] sm:$0xff]
    %v40 = vld [vmem:[#allocation5 + $0x8] sm:$0xff]
    %v41 = vld [vmem:[#allocation5 + $0x10] sm:$0xff]
    %v42 = vld [vmem:[#allocation5 + $0x18] sm:$0xff]
    %vm43 = vcmask 261120
    %v45 = vsel %vm43, %v38, 0
    %47 = vmatprep.subr.mxu0 0.0
    %48 = vmatpush1.msra.mxu0 %v39
    %49 = vmatprep.subr.mxu0 0.0
    %50 = vmatpush1.msra.mxu0 %v40
    %51 = vmatprep.subr.mxu0 0.0
    %52 = vmatpush1.msra.mxu0 %v41
    %53 = vmatprep.subr.mxu0 0.0
    %54 = vmatpush1.msra.mxu0 %v42
    %55 = vmatprep.subr.mxu0 0.0
    %56 = vmatpush1.msra.mxu0 0.0
    %57 = vmatprep.subr.mxu0 0.0
    %58 = vmatpush1.msra.mxu0 0.0
    %59 = vmatprep.subr.mxu0 0.0
    %60 = vmatpush1.msra.mxu0 0.0
    %61 = vmatprep.subr.mxu0 0.0
    %62 = vmatpush1.msra.mxu0 0.0
    %63 = vmatprep.subr.mxu0 0.0
    %64 = vmatpush1.msra.mxu0 0.0
    %65 = vmatprep.subr.mxu0 0.0
    %66 = vmatpush1.msra.mxu0 0.0
    %67 = vmatprep.subr.mxu0 0.0
    %68 = vmatpush1.msra.mxu0 0.0
    %69 = vmatprep.subr.mxu0 0.0
    %70 = vmatpush1.msra.mxu0 0.0
    %71 = vmatprep.subr.mxu0 0.0
    %72 = vmatpush1.msra.mxu0 0.0
    %73 = vmatprep.subr.mxu0 0.0
    %74 = vmatpush1.msra.mxu0 0.0
    %75 = vmatprep.subr.mxu0 0.0
    %76 = vmatpush1.msra.mxu0 0.0
    %77 = vmatprep.subr.mxu0 0.0
    %78 = vmatpush1.msra.mxu0 0.0
    %79 = vmatprep.subr.mxu0 0.0
    %80 = vmatpush1.msra.mxu0 0.0
    %81 = vmatprep.subr.mxu0 0.0
    %82 = vmatpush1.msra.mxu0 0.0
    %83 = vmatprep.subr.mxu0 0.0
    %84 = vmatpush1.msra.mxu0 0.0
    %85 = vmatprep.subr.mxu0 0.0
    %86 = vmatpush1.msra.mxu0 0.0
    %87 = vmatprep.subr.mxu0 0.0
    %88 = vmatpush1.msra.mxu0 0.0
    %89 = vmatprep.subr.mxu0 0.0
    %90 = vmatpush1.msra.mxu0 0.0
    %91 = vmatprep.subr.mxu0 0.0
    %92 = vmatpush1.msra.mxu0 0.0
    %93 = vmatprep.subr.mxu0 0.0
    %94 = vmatpush1.msra.mxu0 0.0
    %95 = vmatprep.subr.mxu0 0.0
    %96 = vmatpush1.msra.mxu0 0.0
    %97 = vmatprep.subr.mxu0 0.0
    %98 = vmatpush1.msra.mxu0 0.0
    %99 = vmatprep.subr.mxu0 0.0
    %100 = vmatpush1.msra.mxu0 0.0
    %101 = vmatprep.subr.mxu0 0.0
    %102 = vmatpush1.msra.mxu0 0.0
    %103 = vmatprep.subr.mxu0 0.0
    %104 = vmatpush1.msra.mxu0 0.0
    %105 = vmatprep.subr.mxu0 0.0
    %106 = vmatpush1.msra.mxu0 0.0
    %107 = vmatprep.subr.mxu0 0.0
    %108 = vmatpush1.msra.mxu0 0.0
    %109 = vmatprep.subr.mxu0 0.0
    %110 = vmatpush1.msra.mxu0 0.0
    %111 = vmatprep.mubr.f32.mxu0 0.0
    %112 = vmatmul.mubr.f32.gmra.mrb[0].mxu0 %v45
    %v113 = vpop.f32.mrb[0].mxu0
    %v114 = vadd.f32 0.0, %v113
    %v115 = vpop.f32.mrb[0].mxu0
    %116 = vdwg.mxu0
    %v117 = vlaneseq
    %v118 = vand.u32 %v117, 127
    %vm119 = vcmp.ge.s32.totalorder %v118, 32
    %v120 = vsel %vm119, %v114, 0.0
    %122 = vrot.lane.b32.xlu0 %v114, 112
    %v123 = vpop.permute.xlu0 %122
    %vm124 = vcmask 130048
    %v125 = vsel %vm124, %v114, 0
    %v127 = vsel %vm124, %v123, 0
    %129 = vmatprep.subr.mxu0 0.0
    %130 = vmatpush1.xpose.msra.mxu0 %v127
    %131 = vmatprep.subr.mxu0 0.0
    %132 = vmatpush1.xpose.msra.mxu0 0.0
    %133 = vmatprep.subr.mxu0 0.0
    %134 = vmatpush1.xpose.msra.mxu0 0.0
    %135 = vmatprep.subr.mxu0 0.0
    %136 = vmatpush1.xpose.msra.mxu0 0.0
    %137 = vmatprep.subr.mxu0 0.0
    %138 = vmatpush1.xpose.msra.mxu0 0.0
    %139 = vmatprep.subr.mxu0 0.0
    %140 = vmatpush1.xpose.msra.mxu0 0.0
    %141 = vmatprep.subr.mxu0 0.0
    %142 = vmatpush1.xpose.msra.mxu0 0.0
    %143 = vmatprep.subr.mxu0 0.0
    %144 = vmatpush1.xpose.msra.mxu0 0.0
    %145 = vmatprep.subr.mxu0 0.0
    %146 = vmatpush1.xpose.msra.mxu0 0.0
    %147 = vmatprep.subr.mxu0 0.0
    %148 = vmatpush1.xpose.msra.mxu0 0.0
    %149 = vmatprep.subr.mxu0 0.0
    %150 = vmatpush1.xpose.msra.mxu0 0.0
    %151 = vmatprep.subr.mxu0 0.0
    %152 = vmatpush1.xpose.msra.mxu0 0.0
    %153 = vmatprep.subr.mxu0 0.0
    %154 = vmatpush1.xpose.msra.mxu0 0.0
    %155 = vmatprep.subr.mxu0 0.0
    %156 = vmatpush1.xpose.msra.mxu0 0.0
    %157 = vmatprep.subr.mxu0 0.0
    %158 = vmatpush1.xpose.msra.mxu0 0.0
    %159 = vmatprep.subr.mxu0 0.0
    %160 = vmatpush1.xpose.msra.mxu0 0.0
    %161 = vmatprep.subr.mxu0 0.0
    %162 = vmatpush1.xpose.msra.mxu0 0.0
    %163 = vmatprep.subr.mxu0 0.0
    %164 = vmatpush1.xpose.msra.mxu0 0.0
    %165 = vmatprep.subr.mxu0 0.0
    %166 = vmatpush1.xpose.msra.mxu0 0.0
    %167 = vmatprep.subr.mxu0 0.0
    %168 = vmatpush1.xpose.msra.mxu0 0.0
    %169 = vmatprep.subr.mxu0 0.0
    %170 = vmatpush1.xpose.msra.mxu0 0.0
    %171 = vmatprep.subr.mxu0 0.0
    %172 = vmatpush1.xpose.msra.mxu0 0.0
    %173 = vmatprep.subr.mxu0 0.0
    %174 = vmatpush1.xpose.msra.mxu0 0.0
    %175 = vmatprep.subr.mxu0 0.0
    %176 = vmatpush1.xpose.msra.mxu0 0.0
    %177 = vmatprep.subr.mxu0 0.0
    %178 = vmatpush1.xpose.msra.mxu0 0.0
    %179 = vmatprep.subr.mxu0 0.0
    %180 = vmatpush1.xpose.msra.mxu0 0.0
    %181 = vmatprep.subr.mxu0 0.0
    %182 = vmatpush1.xpose.msra.mxu0 0.0
    %183 = vmatprep.subr.mxu0 0.0
    %184 = vmatpush1.xpose.msra.mxu0 0.0
    %185 = vmatprep.subr.mxu0 0.0
    %186 = vmatpush1.xpose.msra.mxu0 0.0
    %187 = vmatprep.subr.mxu0 0.0
    %188 = vmatpush1.xpose.msra.mxu0 0.0
    %189 = vmatprep.subr.mxu0 0.0
    %190 = vmatpush1.xpose.msra.mxu0 0.0
    %191 = vmatprep.subr.mxu0 0.0
    %192 = vmatpush1.xpose.msra.mxu0 0.0
    %193 = vmatprep.mubr.f32.mxu0 0.0
    %194 = vmatmul.mubr.f32.gmra.mrb[0].mxu0 %v125
    %v195 = vpop.f32.mrb[0].mxu0
    %v196 = vadd.f32 0.0, %v195
    %v197 = vpop.f32.mrb[0].mxu0
    %198 = vdwg.mxu0
    %vm199 = vcmask 64512
    %v200 = vsel %vm199, %v196, -inf
    %201 = vmax.xlane.f32.xlu0 %v200
    %v202 = vpop.xlane.xlu0 %201
    %v203 = vsub.f32 %v196, %v202
    %v204 = vmul.f32 %v203, 1.442695
    %v205 = vpow.pop %v204
    %v206 = vsel %vm199, %v205, 0.0
    %207 = vadd.xlane.f32.xlu0 %v206
    %v208 = vpop.xlane.xlu0 %207
    %v209 = vrcp.pop %v208
    %v210 = vmul.f32 %v205, %v209
    %v212 = vsel %vm199, %v210, 0
    %214 = vmatprep.subr.mxu0 0.0
    %215 = vmatpush1.msra.mxu0 %v120
    %216 = vmatprep.subr.mxu0 0.0
    %217 = vmatpush1.msra.mxu0 0.0
    %218 = vmatprep.subr.mxu0 0.0
    %219 = vmatpush1.msra.mxu0 0.0
    %220 = vmatprep.subr.mxu0 0.0
    %221 = vmatpush1.msra.mxu0 0.0
    %222 = vmatprep.subr.mxu0 0.0
    %223 = vmatpush1.msra.mxu0 0.0
    %224 = vmatprep.subr.mxu0 0.0
    %225 = vmatpush1.msra.mxu0 0.0
    %226 = vmatprep.subr.mxu0 0.0
    %227 = vmatpush1.msra.mxu0 0.0
    %228 = vmatprep.subr.mxu0 0.0
    %229 = vmatpush1.msra.mxu0 0.0
    %230 = vmatprep.subr.mxu0 0.0
    %231 = vmatpush1.msra.mxu0 0.0
    %232 = vmatprep.subr.mxu0 0.0
    %233 = vmatpush1.msra.mxu0 0.0
    %234 = vmatprep.subr.mxu0 0.0
    %235 = vmatpush1.msra.mxu0 0.0
    %236 = vmatprep.subr.mxu0 0.0
    %237 = vmatpush1.msra.mxu0 0.0
    %238 = vmatprep.subr.mxu0 0.0
    %239 = vmatpush1.msra.mxu0 0.0
    %240 = vmatprep.subr.mxu0 0.0
    %241 = vmatpush1.msra.mxu0 0.0
    %242 = vmatprep.subr.mxu0 0.0
    %243 = vmatpush1.msra.mxu0 0.0
    %244 = vmatprep.subr.mxu0 0.0
    %245 = vmatpush1.msra.mxu0 0.0
    %246 = vmatprep.subr.mxu0 0.0
    %247 = vmatpush1.msra.mxu0 0.0
    %248 = vmatprep.subr.mxu0 0.0
    %249 = vmatpush1.msra.mxu0 0.0
    %250 = vmatprep.subr.mxu0 0.0
    %251 = vmatpush1.msra.mxu0 0.0
    %252 = vmatprep.subr.mxu0 0.0
    %253 = vmatpush1.msra.mxu0 0.0
    %254 = vmatprep.subr.mxu0 0.0
    %255 = vmatpush1.msra.mxu0 0.0
    %256 = vmatprep.subr.mxu0 0.0
    %257 = vmatpush1.msra.mxu0 0.0
    %258 = vmatprep.subr.mxu0 0.0
    %259 = vmatpush1.msra.mxu0 0.0
    %260 = vmatprep.subr.mxu0 0.0
    %261 = vmatpush1.msra.mxu0 0.0
    %262 = vmatprep.subr.mxu0 0.0
    %263 = vmatpush1.msra.mxu0 0.0
    %264 = vmatprep.subr.mxu0 0.0
    %265 = vmatpush1.msra.mxu0 0.0
    %266 = vmatprep.subr.mxu0 0.0
    %267 = vmatpush1.msra.mxu0 0.0
    %268 = vmatprep.subr.mxu0 0.0
    %269 = vmatpush1.msra.mxu0 0.0
    %270 = vmatprep.subr.mxu0 0.0
    %271 = vmatpush1.msra.mxu0 0.0
    %272 = vmatprep.subr.mxu0 0.0
    %273 = vmatpush1.msra.mxu0 0.0
    %274 = vmatprep.subr.mxu0 0.0
    %275 = vmatpush1.msra.mxu0 0.0
    %276 = vmatprep.subr.mxu0 0.0
    %277 = vmatpush1.msra.mxu0 0.0
    %278 = vmatprep.mubr.f32.mxu0 0.0
    %279 = vmatmul.mubr.f32.gmra.mrb[0].mxu0 %v212
    %v280 = vpop.f32.mrb[0].mxu0
    %v281 = vadd.f32 0.0, %v280
    %v282 = vpop.f32.mrb[0].mxu0
    %283 = vdwg.mxu0
    %284 = vst [vmem:[#allocation7] sm:$0xff] %v281
    // Predicated region
    $region18: #{tpu_custom_call.1} parent=1 // pred_check
      _
    $region19: #{tpu_custom_call.1} parent=1 // pred_check_branch
      %286 = sbr.rel (0) target = $region21
    $region20: #{tpu_custom_call.1} parent=1 // pred_region
      %s288 = ssub.s32 128, 128
      %289 = vsyncadd [#allocation4], %s288
      %s291 = sshll.u32 [#allocation7], 4
      %s292 = int_to_ptr.vmem [resolvable:$true] %s291
      %294 = dma.vmem_to_hbm [thread:$0]  %s292, 128, %s2, [#allocation4]
    $region21: #{tpu_custom_call.1} parent=1 // pred_fallthru
      _
    // Predicated region
    $region22: #{tpu_custom_call.1} parent=1 // pred_check
      _
    $region23: #{tpu_custom_call.1} parent=1 // pred_check_branch
      %296 = sbr.rel (0) target = $region25
    $region24: #{tpu_custom_call.1} parent=1 // pred_region
      %297 = dma.done [#allocation4], 128
    $region25: #{tpu_custom_call.1} parent=1 // pred_fallthru
      _
    %298 = vsyncpa [#allocation3], 1
    %299 = vsyncpa [#allocation6], 1
    %300 = vsyncpa [#allocation4], 1

</llo_original>
